<compile_context>
chip_gen: v6e
topology: v6e:2x2x1
jax: 0.10.0
libtpu: 0.0.40
codegen_flags: <defaults>
</compile_context>

<pallas_src>
import functools
import math

import jax
import jax.numpy as jnp
from jax import lax
from jax.experimental import pallas as pl
from jax.experimental.pallas import tpu as pltpu


def _rnn_tanh_kernel(x_ref, h0_ref, wih_ref, whh_ref, b_ref,
                     out_ref, h_scratch, *, n_steps, batch):
    """One grid step == one chunk of `n_steps` timesteps.

    x_ref     : (T*B_pad, I)  flattened time-major input chunk
    h0_ref    : (B_pad, H)    initial hidden state
    wih_ref   : (I, H)        W_ih^T
    whh_ref   : (H, H)        W_hh^T
    b_ref     : (1, H)        b_ih + b_hh  (f32)
    out_ref   : (T*B_pad, H)  flattened output chunk
    h_scratch : (B_pad, H) f32  hidden state carried across chunks
    """
    c = pl.program_id(0)

    @pl.when(c == 0)
    def _():
        h_scratch[...] = h0_ref[...].astype(jnp.float32)

    # ---- Phase 1 (non-recurrent): one chunk-wide MXU GEMM for the input ----
    # projection, written directly into the VMEM-resident output block
    # (no separate projection scratch; bias added once per chunk).
    out_ref[...] = (
        jnp.dot(x_ref[...], wih_ref[...], preferred_element_type=jnp.float32)
        + b_ref[...]
    ).astype(out_ref.dtype)

    # ---- Phase 2 (recurrent): per timestep only h @ W_hh^T + tanh ----------
    whh = whh_ref[...]                       # load once, hoisted out of loop

    def step(t, h):
        row = pl.multiple_of(t * batch, batch)       # batch is a multiple of 8
        proj = out_ref[pl.ds(row, batch), :].astype(jnp.float32)
        h_new = jnp.tanh(
            jnp.dot(h.astype(whh.dtype), whh,
                    preferred_element_type=jnp.float32) + proj)
        out_ref[pl.ds(row, batch), :] = h_new.astype(out_ref.dtype)
        return h_new

    h_scratch[...] = lax.fori_loop(0, n_steps, step, h_scratch[...], unroll=8)


def rnn_decoder_forward(x, h0, w_ih, w_hh, b_ih, b_hh, *, max_chunk=128,
                        mxu_dtype=None, vmem_budget_bytes=48 * 1024 * 1024):
    """x: (B, S, I) batch_first. h0: (1, B, H).

    Returns (out (B, S, H), h_n (1, B, H)) -- same as torch.nn.RNN(tanh).
    """
    B, S, I = x.shape
    H = w_ih.shape[0]

    B_pad = -(-B // 8) * 8                              # full sublane tiles

    w_dtype = jnp.dtype(mxu_dtype) if mxu_dtype is not None else jnp.dtype(jnp.float32)
    x_dtype = jnp.dtype(mxu_dtype) if mxu_dtype is not None else jnp.dtype(x.dtype)
    out_dtype = jnp.dtype(x.dtype)

    def vmem_estimate(t):
        x_blk = t * B_pad * I * x_dtype.itemsize
        out_blk = t * B_pad * H * out_dtype.itemsize
        weights = (I * H + H * H) * w_dtype.itemsize + H * 4 + B_pad * H * 4
        scratch = B_pad * H * 4
        # x/out/weight blocks are double-buffered by the auto-pipeline.
        return 2 * (x_blk + out_blk + weights) + scratch

    # Balanced chunking: all chunks equal length, total padding < n_chunks,
    # shrunk further until the chunk buffers fit the VMEM budget.
    mc = max(1, min(max_chunk, S))
    n_chunks = pl.cdiv(S, mc)
    T = pl.cdiv(S, n_chunks)
    while vmem_estimate(T) > vmem_budget_bytes and T > 8:
        mc = max(8, mc // 2)
        n_chunks = pl.cdiv(S, mc)
        T = pl.cdiv(S, n_chunks)
    S_pad = n_chunks * T

    # Time-major, padded, flattened so the kernel sees clean 2-D slabs
    # (byte-identical in HBM to the (S_pad, B_pad, .) layout).
    x_tm = jnp.transpose(x, (1, 0, 2))                         # (S, B, I)
    x_tm = jnp.pad(x_tm, ((0, S_pad - S), (0, B_pad - B), (0, 0)))
    x_flat = x_tm.reshape(S_pad * B_pad, I).astype(x_dtype)    # (S_pad*B_pad, I)
    h0_p = jnp.pad(h0[0], ((0, B_pad - B), (0, 0))).astype(jnp.float32)

    wih_t = jnp.transpose(w_ih).astype(w_dtype)                # (I, H)
    whh_t = jnp.transpose(w_hh).astype(w_dtype)                # (H, H)
    b = (b_ih + b_hh).reshape(1, H).astype(jnp.float32)        # bias folded once

    vmem_limit = int(min(64 * 1024 * 1024,
                         max(32 * 1024 * 1024, 2 * vmem_estimate(T))))

    kernel = functools.partial(_rnn_tanh_kernel, n_steps=T, batch=B_pad)

    out_flat = pl.pallas_call(
        kernel,
        out_shape=jax.ShapeDtypeStruct((S_pad * B_pad, H), out_dtype),
        grid_spec=pltpu.PrefetchScalarGridSpec(
            num_scalar_prefetch=0,
            grid=(n_chunks,),
            in_specs=[
                pl.BlockSpec((T * B_pad, I), lambda c: (c, 0)),   # x chunk
                pl.BlockSpec((B_pad, H), lambda c: (0, 0)),       # h0
                pl.BlockSpec((I, H), lambda c: (0, 0)),           # W_ih^T
                pl.BlockSpec((H, H), lambda c: (0, 0)),           # W_hh^T
                pl.BlockSpec((1, H), lambda c: (0, 0)),           # bias
            ],
            out_specs=pl.BlockSpec((T * B_pad, H), lambda c: (c, 0)),
            scratch_shapes=[
                pltpu.VMEM((B_pad, H), jnp.float32),   # hidden carry
            ],
        ),
        compiler_params=pltpu.CompilerParams(
            dimension_semantics=("arbitrary",),        # sequential recurrence
            vmem_limit_bytes=vmem_limit),
    )(x_flat, h0_p, wih_t, whh_t, b)

    out_tm = out_flat.reshape(S_pad, B_pad, H)
    out = jnp.transpose(out_tm[:S, :B, :], (1, 0, 2))           # (B, S, H)
    h_n = out[:, S - 1, :][None, :, :]                          # (1, B, H)
    return out, h_n


def _reference_rnn(x, h0, w_ih, w_hh, b_ih, b_hh):
    """Pure-JAX reference (matches torch.nn.RNN tanh forward)."""
    def step(h, x_t):
        h_new = jnp.tanh(x_t @ w_ih.T + b_ih + h @ w_hh.T + b_hh)
        return h_new, h_new
    h_final, ys = lax.scan(step, h0[0], jnp.transpose(x, (1, 0, 2)))
    return jnp.transpose(ys, (1, 0, 2)), h_final[None]


if __name__ == "__main__":
    # Small shapes consistent with RNNDecoder(mode="RNN_TANH", input_size=16,
    # hidden_size=32, num_layers=1, batch_first=True)
    B, S, I, H = 2, 8, 16, 32

    key = jax.random.PRNGKey(0)
    k_x, k_wih, k_whh, k_bih, k_bhh = jax.random.split(key, 5)

    # Parameter init mimicking PyTorch: U(-1/sqrt(H), 1/sqrt(H))
    bound = 1.0 / math.sqrt(H)
    w_ih = jax.random.uniform(k_wih, (H, I), jnp.float32, -bound, bound)
    w_hh = jax.random.uniform(k_whh, (H, H), jnp.float32, -bound, bound)
    b_ih = jax.random.uniform(k_bih, (H,), jnp.float32, -bound, bound)
    b_hh = jax.random.uniform(k_bhh, (H,), jnp.float32, -bound, bound)

    x = jax.random.normal(k_x, (B, S, I), jnp.float32)
    h0 = jnp.zeros((1, B, H), jnp.float32)   # hx=None -> zeros, like PyTorch

    out, h_n = rnn_decoder_forward(x, h0, w_ih, w_hh, b_ih, b_hh)
    out = jax.block_until_ready(out)
    h_n = jax.block_until_ready(h_n)

    ref_out, ref_hn = _reference_rnn(x, h0, w_ih, w_hh, b_ih, b_hh)
    assert out.shape == (B, S, H) and h_n.shape == (1, B, H)
    assert jnp.allclose(out, ref_out, atol=1e-4, rtol=1e-4), "output mismatch"
    assert jnp.allclose(h_n, ref_hn, atol=1e-4, rtol=1e-4), "h_n mismatch"

    print("KERNEL_OK")
</pallas_src>

<mosaic_0001>
module attributes {stable_mosaic.version = 11 : i64} {
  func.func @_rnn_tanh_kernel(%arg0: i32, %arg1: memref<64x16xf32, #tpu.memory_space<vmem>>, %arg2: memref<8x32xf32, #tpu.memory_space<vmem>>, %arg3: memref<16x32xf32, #tpu.memory_space<vmem>>, %arg4: memref<32x32xf32, #tpu.memory_space<vmem>>, %arg5: memref<1x32xf32, #tpu.memory_space<vmem>>, %arg6: memref<64x32xf32, #tpu.memory_space<vmem>>, %arg7: memref<8x32xf32, #tpu.memory_space<vmem>>) attributes {dimension_semantics = [#tpu.dimension_semantics<arbitrary>], iteration_bounds = array<i64: 1>, scalar_prefetch = 0 : i64, scratch_operands = 1 : i64, tpu.core_type = #tpu.core_type<tc>, window_params = [{transform_indices = @transform_0, window_bounds = array<i64: 64, 16>}, {pipeline_mode = #tpu.pipeline_mode<synchronous>, transform_indices = @transform_1, window_bounds = array<i64: 8, 32>}, {pipeline_mode = #tpu.pipeline_mode<synchronous>, transform_indices = @transform_2, window_bounds = array<i64: 16, 32>}, {pipeline_mode = #tpu.pipeline_mode<synchronous>, transform_indices = @transform_3, window_bounds = array<i64: 32, 32>}, {pipeline_mode = #tpu.pipeline_mode<synchronous>, transform_indices = @transform_4, window_bounds = array<i64: 1, 32>}, {transform_indices = @transform_5, window_bounds = array<i64: 64, 32>}]} {
    %c0_i32 = arith.constant 0 : i32
    %0 = arith.cmpi eq, %arg0, %c0_i32 : i32
    %1 = arith.extui %0 : i1 to i32
    %c0_i32_0 = arith.constant 0 : i32
    %2 = arith.cmpi ne, %1, %c0_i32_0 : i32
    scf.if %2 {
      %c0_47 = arith.constant 0 : index
      %c0_48 = arith.constant 0 : index
      %85 = vector.load %arg2[%c0_47, %c0_48] : memref<8x32xf32, #tpu.memory_space<vmem>>, vector<8x32xf32>
      %c0_49 = arith.constant 0 : index
      %c0_50 = arith.constant 0 : index
      %86 = vector.load %arg7[%c0_49, %c0_50] : memref<8x32xf32, #tpu.memory_space<vmem>>, vector<8x32xf32>
      tpu.vector_store %arg7[%c0_49, %c0_50], %85 {strides = array<i32>} : memref<8x32xf32, #tpu.memory_space<vmem>>, vector<8x32xf32>,
    } else {
    }
    %c0 = arith.constant 0 : index
    %c0_1 = arith.constant 0 : index
    %3 = vector.load %arg1[%c0, %c0_1] : memref<64x16xf32, #tpu.memory_space<vmem>>, vector<64x16xf32>
    %c0_2 = arith.constant 0 : index
    %c0_3 = arith.constant 0 : index
    %4 = vector.load %arg3[%c0_2, %c0_3] : memref<16x32xf32, #tpu.memory_space<vmem>>, vector<16x32xf32>
    %cst = arith.constant dense<0.000000e+00> : vector<64x32xf32>
    %5 = tpu.matmul %3, %4, %cst {dimension_numbers = #tpu.dot_dimension_numbers<[1], [0], [0], [1], [0, 0, 1, 1], [], []>} : vector<64x16xf32>, vector<16x32xf32>, vector<64x32xf32> -> vector<64x32xf32>
    %c0_4 = arith.constant 0 : index
    %c0_5 = arith.constant 0 : index
    %6 = vector.load %arg5[%c0_4, %c0_5] : memref<1x32xf32, #tpu.memory_space<vmem>>, vector<1x32xf32>
    %7 = vector.broadcast %6 : vector<1x32xf32> to vector<64x32xf32>
    %8 = arith.addf %5, %7 : vector<64x32xf32>
    %c0_6 = arith.constant 0 : index
    %c0_7 = arith.constant 0 : index
    %9 = vector.load %arg6[%c0_6, %c0_7] : memref<64x32xf32, #tpu.memory_space<vmem>>, vector<64x32xf32>
    tpu.vector_store %arg6[%c0_6, %c0_7], %8 {strides = array<i32>} : memref<64x32xf32, #tpu.memory_space<vmem>>, vector<64x32xf32>,
    %c0_8 = arith.constant 0 : index
    %c0_9 = arith.constant 0 : index
    %10 = vector.load %arg4[%c0_8, %c0_9] : memref<32x32xf32, #tpu.memory_space<vmem>>, vector<32x32xf32>
    %c0_10 = arith.constant 0 : index
    %c0_11 = arith.constant 0 : index
    %11 = vector.load %arg7[%c0_10, %c0_11] : memref<8x32xf32, #tpu.memory_space<vmem>>, vector<8x32xf32>
    %c0_i32_12 = arith.constant 0 : i32
    %c8_i32 = arith.constant 8 : i32
    %12 = arith.muli %c0_i32_12, %c8_i32 : i32
    %13 = tpu.assume_multiple %12, 8 : i32
    %14 = arith.index_cast %13 : i32 to index
    %c0_13 = arith.constant 0 : index
    %15 = vector.load %arg6[%14, %c0_13] : memref<64x32xf32, #tpu.memory_space<vmem>>, vector<8x32xf32>
    %cst_14 = arith.constant dense<0.000000e+00> : vector<8x32xf32>
    %16 = tpu.matmul %11, %10, %cst_14 {dimension_numbers = #tpu.dot_dimension_numbers<[1], [0], [0], [1], [0, 0, 1, 1], [], []>} : vector<8x32xf32>, vector<32x32xf32>, vector<8x32xf32> -> vector<8x32xf32>
    %17 = arith.addf %16, %15 : vector<8x32xf32>
    %18 = math.tanh %17 : vector<8x32xf32>
    %19 = arith.index_cast %13 : i32 to index
    %c0_15 = arith.constant 0 : index
    %20 = vector.load %arg6[%19, %c0_15] : memref<64x32xf32, #tpu.memory_space<vmem>>, vector<8x32xf32>
    tpu.vector_store %arg6[%19, %c0_15], %18 {strides = array<i32>} : memref<64x32xf32, #tpu.memory_space<vmem>>, vector<8x32xf32>,
    %c1_i32 = arith.constant 1 : i32
    %c8_i32_16 = arith.constant 8 : i32
    %21 = arith.muli %c1_i32, %c8_i32_16 : i32
    %22 = tpu.assume_multiple %21, 8 : i32
    %23 = arith.index_cast %22 : i32 to index
    %c0_17 = arith.constant 0 : index
    %24 = vector.load %arg6[%23, %c0_17] : memref<64x32xf32, #tpu.memory_space<vmem>>, vector<8x32xf32>
    %cst_18 = arith.constant dense<0.000000e+00> : vector<8x32xf32>
    %25 = tpu.matmul %18, %10, %cst_18 {dimension_numbers = #tpu.dot_dimension_numbers<[1], [0], [0], [1], [0, 0, 1, 1], [], []>} : vector<8x32xf32>, vector<32x32xf32>, vector<8x32xf32> -> vector<8x32xf32>
    %26 = arith.addf %25, %24 : vector<8x32xf32>
    %27 = math.tanh %26 : vector<8x32xf32>
    %28 = arith.index_cast %22 : i32 to index
    %c0_19 = arith.constant 0 : index
    %29 = vector.load %arg6[%28, %c0_19] : memref<64x32xf32, #tpu.memory_space<vmem>>, vector<8x32xf32>
    tpu.vector_store %arg6[%28, %c0_19], %27 {strides = array<i32>} : memref<64x32xf32, #tpu.memory_space<vmem>>, vector<8x32xf32>,
    %c2_i32 = arith.constant 2 : i32
    %c8_i32_20 = arith.constant 8 : i32
    %30 = arith.muli %c2_i32, %c8_i32_20 : i32
    %31 = tpu.assume_multiple %30, 8 : i32
    %32 = arith.index_cast %31 : i32 to index
    %c0_21 = arith.constant 0 : index
    %33 = vector.load %arg6[%32, %c0_21] : memref<64x32xf32, #tpu.memory_space<vmem>>, vector<8x32xf32>
    %cst_22 = arith.constant dense<0.000000e+00> : vector<8x32xf32>
    %34 = tpu.matmul %27, %10, %cst_22 {dimension_numbers = #tpu.dot_dimension_numbers<[1], [0], [0], [1], [0, 0, 1, 1], [], []>} : vector<8x32xf32>, vector<32x32xf32>, vector<8x32xf32> -> vector<8x32xf32>
    %35 = arith.addf %34, %33 : vector<8x32xf32>
    %36 = math.tanh %35 : vector<8x32xf32>
    %37 = arith.index_cast %31 : i32 to index
    %c0_23 = arith.constant 0 : index
    %38 = vector.load %arg6[%37, %c0_23] : memref<64x32xf32, #tpu.memory_space<vmem>>, vector<8x32xf32>
    tpu.vector_store %arg6[%37, %c0_23], %36 {strides = array<i32>} : memref<64x32xf32, #tpu.memory_space<vmem>>, vector<8x32xf32>,
    %c3_i32 = arith.constant 3 : i32
    %c8_i32_24 = arith.constant 8 : i32
    %39 = arith.muli %c3_i32, %c8_i32_24 : i32
    %40 = tpu.assume_multiple %39, 8 : i32
    %41 = arith.index_cast %40 : i32 to index
    %c0_25 = arith.constant 0 : index
    %42 = vector.load %arg6[%41, %c0_25] : memref<64x32xf32, #tpu.memory_space<vmem>>, vector<8x32xf32>
    %cst_26 = arith.constant dense<0.000000e+00> : vector<8x32xf32>
    %43 = tpu.matmul %36, %10, %cst_26 {dimension_numbers = #tpu.dot_dimension_numbers<[1], [0], [0], [1], [0, 0, 1, 1], [], []>} : vector<8x32xf32>, vector<32x32xf32>, vector<8x32xf32> -> vector<8x32xf32>
    %44 = arith.addf %43, %42 : vector<8x32xf32>
    %45 = math.tanh %44 : vector<8x32xf32>
    %46 = arith.index_cast %40 : i32 to index
    %c0_27 = arith.constant 0 : index
    %47 = vector.load %arg6[%46, %c0_27] : memref<64x32xf32, #tpu.memory_space<vmem>>, vector<8x32xf32>
    tpu.vector_store %arg6[%46, %c0_27], %45 {strides = array<i32>} : memref<64x32xf32, #tpu.memory_space<vmem>>, vector<8x32xf32>,
    %c4_i32 = arith.constant 4 : i32
    %c8_i32_28 = arith.constant 8 : i32
    %48 = arith.muli %c4_i32, %c8_i32_28 : i32
    %49 = tpu.assume_multiple %48, 8 : i32
    %50 = arith.index_cast %49 : i32 to index
    %c0_29 = arith.constant 0 : index
    %51 = vector.load %arg6[%50, %c0_29] : memref<64x32xf32, #tpu.memory_space<vmem>>, vector<8x32xf32>
    %cst_30 = arith.constant dense<0.000000e+00> : vector<8x32xf32>
    %52 = tpu.matmul %45, %10, %cst_30 {dimension_numbers = #tpu.dot_dimension_numbers<[1], [0], [0], [1], [0, 0, 1, 1], [], []>} : vector<8x32xf32>, vector<32x32xf32>, vector<8x32xf32> -> vector<8x32xf32>
    %53 = arith.addf %52, %51 : vector<8x32xf32>
    %54 = math.tanh %53 : vector<8x32xf32>
    %55 = arith.index_cast %49 : i32 to index
    %c0_31 = arith.constant 0 : index
    %56 = vector.load %arg6[%55, %c0_31] : memref<64x32xf32, #tpu.memory_space<vmem>>, vector<8x32xf32>
    tpu.vector_store %arg6[%55, %c0_31], %54 {strides = array<i32>} : memref<64x32xf32, #tpu.memory_space<vmem>>, vector<8x32xf32>,
    %c5_i32 = arith.constant 5 : i32
    %c8_i32_32 = arith.constant 8 : i32
    %57 = arith.muli %c5_i32, %c8_i32_32 : i32
    %58 = tpu.assume_multiple %57, 8 : i32
    %59 = arith.index_cast %58 : i32 to index
    %c0_33 = arith.constant 0 : index
    %60 = vector.load %arg6[%59, %c0_33] : memref<64x32xf32, #tpu.memory_space<vmem>>, vector<8x32xf32>
    %cst_34 = arith.constant dense<0.000000e+00> : vector<8x32xf32>
    %61 = tpu.matmul %54, %10, %cst_34 {dimension_numbers = #tpu.dot_dimension_numbers<[1], [0], [0], [1], [0, 0, 1, 1], [], []>} : vector<8x32xf32>, vector<32x32xf32>, vector<8x32xf32> -> vector<8x32xf32>
    %62 = arith.addf %61, %60 : vector<8x32xf32>
    %63 = math.tanh %62 : vector<8x32xf32>
    %64 = arith.index_cast %58 : i32 to index
    %c0_35 = arith.constant 0 : index
    %65 = vector.load %arg6[%64, %c0_35] : memref<64x32xf32, #tpu.memory_space<vmem>>, vector<8x32xf32>
    tpu.vector_store %arg6[%64, %c0_35], %63 {strides = array<i32>} : memref<64x32xf32, #tpu.memory_space<vmem>>, vector<8x32xf32>,
    %c6_i32 = arith.constant 6 : i32
    %c8_i32_36 = arith.constant 8 : i32
    %66 = arith.muli %c6_i32, %c8_i32_36 : i32
    %67 = tpu.assume_multiple %66, 8 : i32
    %68 = arith.index_cast %67 : i32 to index
    %c0_37 = arith.constant 0 : index
    %69 = vector.load %arg6[%68, %c0_37] : memref<64x32xf32, #tpu.memory_space<vmem>>, vector<8x32xf32>
    %cst_38 = arith.constant dense<0.000000e+00> : vector<8x32xf32>
    %70 = tpu.matmul %63, %10, %cst_38 {dimension_numbers = #tpu.dot_dimension_numbers<[1], [0], [0], [1], [0, 0, 1, 1], [], []>} : vector<8x32xf32>, vector<32x32xf32>, vector<8x32xf32> -> vector<8x32xf32>
    %71 = arith.addf %70, %69 : vector<8x32xf32>
    %72 = math.tanh %71 : vector<8x32xf32>
    %73 = arith.index_cast %67 : i32 to index
    %c0_39 = arith.constant 0 : index
    %74 = vector.load %arg6[%73, %c0_39] : memref<64x32xf32, #tpu.memory_space<vmem>>, vector<8x32xf32>
    tpu.vector_store %arg6[%73, %c0_39], %72 {strides = array<i32>} : memref<64x32xf32, #tpu.memory_space<vmem>>, vector<8x32xf32>,
    %c7_i32 = arith.constant 7 : i32
    %c8_i32_40 = arith.constant 8 : i32
    %75 = arith.muli %c7_i32, %c8_i32_40 : i32
    %76 = tpu.assume_multiple %75, 8 : i32
    %77 = arith.index_cast %76 : i32 to index
    %c0_41 = arith.constant 0 : index
    %78 = vector.load %arg6[%77, %c0_41] : memref<64x32xf32, #tpu.memory_space<vmem>>, vector<8x32xf32>
    %cst_42 = arith.constant dense<0.000000e+00> : vector<8x32xf32>
    %79 = tpu.matmul %72, %10, %cst_42 {dimension_numbers = #tpu.dot_dimension_numbers<[1], [0], [0], [1], [0, 0, 1, 1], [], []>} : vector<8x32xf32>, vector<32x32xf32>, vector<8x32xf32> -> vector<8x32xf32>
    %80 = arith.addf %79, %78 : vector<8x32xf32>
    %81 = math.tanh %80 : vector<8x32xf32>
    %82 = arith.index_cast %76 : i32 to index
    %c0_43 = arith.constant 0 : index
    %83 = vector.load %arg6[%82, %c0_43] : memref<64x32xf32, #tpu.memory_space<vmem>>, vector<8x32xf32>
    tpu.vector_store %arg6[%82, %c0_43], %81 {strides = array<i32>} : memref<64x32xf32, #tpu.memory_space<vmem>>, vector<8x32xf32>,
    %c8_i32_44 = arith.constant 8 : i32
    %c0_45 = arith.constant 0 : index
    %c0_46 = arith.constant 0 : index
    %84 = vector.load %arg7[%c0_45, %c0_46] : memref<8x32xf32, #tpu.memory_space<vmem>>, vector<8x32xf32>
    tpu.vector_store %arg7[%c0_45, %c0_46], %81 {strides = array<i32>} : memref<8x32xf32, #tpu.memory_space<vmem>>, vector<8x32xf32>,
    return
  }
  func.func @transform_0(%arg0: i32) -> (i32, i32) {
    %c0_i32 = arith.constant 0 : i32
    %c0_i32_0 = arith.constant 0 : i32
    return %arg0, %c0_i32 : i32, i32
  }
  func.func @transform_1(%arg0: i32) -> (i32, i32) {
    %c0_i32 = arith.constant 0 : i32
    %c0_i32_0 = arith.constant 0 : i32
    %c0_i32_1 = arith.constant 0 : i32
    return %c0_i32, %c0_i32_0 : i32, i32
  }
  func.func @transform_2(%arg0: i32) -> (i32, i32) {
    %c0_i32 = arith.constant 0 : i32
    %c0_i32_0 = arith.constant 0 : i32
    %c0_i32_1 = arith.constant 0 : i32
    return %c0_i32, %c0_i32_0 : i32, i32
  }
  func.func @transform_3(%arg0: i32) -> (i32, i32) {
    %c0_i32 = arith.constant 0 : i32
    %c0_i32_0 = arith.constant 0 : i32
    %c0_i32_1 = arith.constant 0 : i32
    return %c0_i32, %c0_i32_0 : i32, i32
  }
  func.func @transform_4(%arg0: i32) -> (i32, i32) {
    %c0_i32 = arith.constant 0 : i32
    %c0_i32_0 = arith.constant 0 : i32
    %c0_i32_1 = arith.constant 0 : i32
    return %c0_i32, %c0_i32_0 : i32, i32
  }
  func.func @transform_5(%arg0: i32) -> (i32, i32) {
    %c0_i32 = arith.constant 0 : i32
    %c0_i32_0 = arith.constant 0 : i32
    return %arg0, %c0_i32 : i32, i32
  }
}

</mosaic_0001>

<llo_original>
// kernel: tpu_custom_call.1
$region0: #{tpu_custom_call.1}
  #allocation0 [shape = 'u32[]', space=smem, size = 0x4, offset = 0x4, fixed_abs, tag = 'smem constant byte address 0x4 - core index']
  #allocation1 [shape = 'u32[144,128]{1,0:T(1,128)}', space=vmem, size = 0x12000, scoped, tag = 'internal scratch']
  #allocation2 [shape = 'f32[8,32]{1,0:T(8,128)}', space=vmem, size = 0x1000, scoped, tag = 'scratch operand']
  %s0 = inlined_call_operand.vmem [shape: f32[64,16], index: 0, kind: input, shape index: {}]
  %s1 = inlined_call_operand.vmem [shape: f32[8,32], index: 1, kind: input, shape index: {}]
  %s2 = inlined_call_operand.vmem [shape: f32[16,32], index: 2, kind: input, shape index: {}]
  %s3 = inlined_call_operand.vmem [shape: f32[32,32], index: 3, kind: input, shape index: {}]
  %s4 = inlined_call_operand.vmem [shape: f32[1,32], index: 4, kind: input, shape index: {}]
  %s5 = inlined_call_operand.vmem [shape: f32[64,32], index: 5, kind: output, shape index: {}]
  %s6 = sld [smem:[#allocation0]]
  $region34: #{tpu_custom_call.1} parent=0
    _
  %s8 = ssub.s32 1, %s6
  %s9 = scalar_select 0, %s8, %s6
  // Predicated region
  $region2: #{tpu_custom_call.1} parent=0 // pred_check
    _
  $region3: #{tpu_custom_call.1} parent=0 // pred_check_branch
    %11 = sbr.rel (0) target = $region5
  $region4: #{tpu_custom_call.1} parent=0 // pred_region
    _
  $region5: #{tpu_custom_call.1} parent=0 // pred_fallthru
    _
  // Predicated region
  $region6: #{tpu_custom_call.1} parent=0 // pred_check
    _
  $region7: #{tpu_custom_call.1} parent=0 // pred_check_branch
    %13 = sbr.rel (0) target = $region9
  $region8: #{tpu_custom_call.1} parent=0 // pred_region
    _
  $region9: #{tpu_custom_call.1} parent=0 // pred_fallthru
    _
  // Predicated region
  $region10: #{tpu_custom_call.1} parent=0 // pred_check
    _
  $region11: #{tpu_custom_call.1} parent=0 // pred_check_branch
    %15 = sbr.rel (0) target = $region13
  $region12: #{tpu_custom_call.1} parent=0 // pred_region
    _
  $region13: #{tpu_custom_call.1} parent=0 // pred_fallthru
    _
  // Predicated region
  $region14: #{tpu_custom_call.1} parent=0 // pred_check
    _
  $region15: #{tpu_custom_call.1} parent=0 // pred_check_branch
    %17 = sbr.rel (0) target = $region17
  $region16: #{tpu_custom_call.1} parent=0 // pred_region
    _
  $region17: #{tpu_custom_call.1} parent=0 // pred_fallthru
    _
  // Predicated region
  $region18: #{tpu_custom_call.1} parent=0 // pred_check
    _
  $region19: #{tpu_custom_call.1} parent=0 // pred_check_branch
    %19 = sbr.rel (0) target = $region21
  $region20: #{tpu_custom_call.1} parent=0 // pred_region
    _
  $region21: #{tpu_custom_call.1} parent=0 // pred_fallthru
    _
  %p20 = scmp.eq.s32.totalorder 0, 0
  // Predicated region
  $region22: #{tpu_custom_call.1} parent=0 // pred_check
    %p21 = pneg %p20
  $region23: #{tpu_custom_call.1} parent=0 // pred_check_branch
    %23 = sbr.rel (%p21) target = $region25
  $region24: #{tpu_custom_call.1} parent=0 // pred_region
    %v24 = vld [vmem:[%s1] sm:$0xff]
    %vm25 = vcmask 261120
    %26 = vst.msk [vmem:[#allocation2] sm:$0xff] %vm25, %v24
  $region25: #{tpu_custom_call.1} parent=0 // pred_fallthru
    _
  %v27 = vld [vmem:[%s0] sm:$0xff]
  %v28 = vld [vmem:[%s0 + $0x8] sm:$0xff]
  %v29 = vld [vmem:[%s0 + $0x10] sm:$0xff]
  %v30 = vld [vmem:[%s0 + $0x18] sm:$0xff]
  %v31 = vld [vmem:[%s0 + $0x20] sm:$0xff]
  %v32 = vld [vmem:[%s0 + $0x28] sm:$0xff]
  %v33 = vld [vmem:[%s0 + $0x30] sm:$0xff]
  %v34 = vld [vmem:[%s0 + $0x38] sm:$0xff]
  %v35 = vld [vmem:[%s2] sm:$0xff]
  %v36 = vld [vmem:[%s2 + $0x8] sm:$0xff]
  %v37 = vld [vmem:[%s4] sm:$0x1]
  %v39 = vlaneseq
  %v40 = vshrl.u32 %v39, 7
  %v41 = vsub.s32 0, %v40
  %v42 = vrot.slane %v37, %v41
  %vm44 = vcmask 130048
  %v46 = vsel %vm44, %v27, 0
  %v49 = vsel %vm44, %v28, 0
  %v52 = vsel %vm44, %v29, 0
  %v55 = vsel %vm44, %v30, 0
  %v58 = vsel %vm44, %v31, 0
  %v61 = vsel %vm44, %v32, 0
  %v64 = vsel %vm44, %v33, 0
  %v67 = vsel %vm44, %v34, 0
  %69 = vmatprep.subr.mxu0 0.0
  %70 = vmatpush1.msra.mxu0 0.0
  %71 = vmatprep.subr.mxu0 0.0
  %72 = vmatpush1.msra.mxu0 0.0
  %73 = vmatprep.subr.mxu0 0.0
  %74 = vmatpush1.msra.mxu0 0.0
  %75 = vmatprep.subr.mxu0 0.0
  %76 = vmatpush1.msra.mxu0 0.0
  %77 = vmatprep.subr.mxu0 0.0
  %78 = vmatpush1.msra.mxu0 0.0
  %79 = vmatprep.subr.mxu0 0.0
  %80 = vmatpush1.msra.mxu0 0.0
  %81 = vmatprep.subr.mxu0 0.0
  %82 = vmatpush1.msra.mxu0 0.0
  %83 = vmatprep.subr.mxu0 0.0
  %84 = vmatpush1.msra.mxu0 0.0
  %85 = vmatprep.subr.mxu0 0.0
  %86 = vmatpush1.msra.mxu0 0.0
  %87 = vmatprep.subr.mxu0 0.0
  %88 = vmatpush1.msra.mxu0 0.0
  %89 = vmatprep.subr.mxu0 0.0
  %90 = vmatpush1.msra.mxu0 0.0
  %91 = vmatprep.subr.mxu0 0.0
  %92 = vmatpush1.msra.mxu0 0.0
  %93 = vmatprep.subr.mxu0 0.0
  %94 = vmatpush1.msra.mxu0 0.0
  %95 = vmatprep.subr.mxu0 0.0
  %96 = vmatpush1.msra.mxu0 0.0
  %97 = vmatprep.subr.mxu0 0.0
  %98 = vmatpush1.msra.mxu0 %v36
  %99 = vmatprep.subr.mxu0 0.0
  %100 = vmatpush1.msra.mxu0 %v35
  %101 = vmatprep.subr.mxu0 0.0
  %102 = vmatpush2.msra.mxu0 0.0
  %103 = vmatprep.subr.mxu0 0.0
  %104 = vmatpush2.msra.mxu0 0.0
  %105 = vmatprep.subr.mxu0 0.0
  %106 = vmatpush2.msra.mxu0 0.0
  %107 = vmatprep.subr.mxu0 0.0
  %108 = vmatpush2.msra.mxu0 0.0
  %109 = vmatprep.subr.mxu0 0.0
  %110 = vmatpush2.msra.mxu0 0.0
  %111 = vmatprep.subr.mxu0 0.0
  %112 = vmatpush2.msra.mxu0 0.0
  %113 = vmatprep.subr.mxu0 0.0
  %114 = vmatpush2.msra.mxu0 0.0
  %115 = vmatprep.subr.mxu0 0.0
  %116 = vmatpush2.msra.mxu0 0.0
  %117 = vmatprep.subr.mxu0 0.0
  %118 = vmatpush2.msra.mxu0 0.0
  %119 = vmatprep.subr.mxu0 0.0
  %120 = vmatpush2.msra.mxu0 0.0
  %121 = vmatprep.subr.mxu0 0.0
  %122 = vmatpush2.msra.mxu0 0.0
  %123 = vmatprep.subr.mxu0 0.0
  %124 = vmatpush2.msra.mxu0 0.0
  %125 = vmatprep.subr.mxu0 0.0
  %126 = vmatpush2.msra.mxu0 0.0
  %127 = vmatprep.subr.mxu0 0.0
  %128 = vmatpush2.msra.mxu0 0.0
  %129 = vmatprep.subr.mxu0 0.0
  %130 = vmatpush2.msra.mxu0 0.0
  %131 = vmatprep.subr.mxu0 0.0
  %132 = vmatpush2.msra.mxu0 0.0
  %133 = vmatprep.mubr.f32.mxu0 0.0
  %134 = vmatmul.mubr.f32.gmra.mxu0 %v46
  %v135 = vpop.f32.mrf.mxu0
  %v136 = vadd.f32 %v42, %v135
  %v137 = vpop.f32.mrf.mxu0
  %138 = vmatprep.mubr.f32.mxu0 0.0
  %139 = vmatmul.mubr.f32.gmra.mxu0 %v49
  %v140 = vpop.f32.mrf.mxu0
  %v141 = vadd.f32 %v42, %v140
  %v142 = vpop.f32.mrf.mxu0
  %143 = vmatprep.mubr.f32.mxu0 0.0
  %144 = vmatmul.mubr.f32.gmra.mxu0 %v52
  %v145 = vpop.f32.mrf.mxu0
  %v146 = vadd.f32 %v42, %v145
  %v147 = vpop.f32.mrf.mxu0
  %148 = vmatprep.mubr.f32.mxu0 0.0
  %149 = vmatmul.mubr.f32.gmra.mxu0 %v55
  %v150 = vpop.f32.mrf.mxu0
  %v151 = vadd.f32 %v42, %v150
  %v152 = vpop.f32.mrf.mxu0
  %153 = vmatprep.mubr.f32.mxu0 0.0
  %154 = vmatmul.mubr.f32.gmra.mxu0 %v58
  %v155 = vpop.f32.mrf.mxu0
  %v156 = vadd.f32 %v42, %v155
  %v157 = vpop.f32.mrf.mxu0
  %158 = vmatprep.mubr.f32.mxu0 0.0
  %159 = vmatmul.mubr.f32.gmra.mxu0 %v61
  %v160 = vpop.f32.mrf.mxu0
  %v161 = vadd.f32 %v42, %v160
  %v162 = vpop.f32.mrf.mxu0
  %163 = vmatprep.mubr.f32.mxu0 0.0
  %164 = vmatmul.mubr.f32.gmra.mxu0 %v64
  %v165 = vpop.f32.mrf.mxu0
  %v166 = vadd.f32 %v42, %v165
  %v167 = vpop.f32.mrf.mxu0
  %168 = vmatprep.mubr.f32.mxu0 0.0
  %169 = vmatmul.mubr.f32.gmra.mxu0 %v67
  %v170 = vpop.f32.mrf.mxu0
  %v171 = vadd.f32 %v42, %v170
  %v172 = vpop.f32.mrf.mxu0
  %173 = vdwg.mxu0
  %vm174 = vcmask 261120
  %175 = vst.msk [vmem:[%s5] sm:$0xff] %vm174, %v136
  %176 = vst.msk [vmem:[%s5 + $0x8] sm:$0xff] %vm174, %v141
  %177 = vst.msk [vmem:[%s5 + $0x10] sm:$0xff] %vm174, %v146
  %178 = vst.msk [vmem:[%s5 + $0x18] sm:$0xff] %vm174, %v151
  %179 = vst.msk [vmem:[%s5 + $0x20] sm:$0xff] %vm174, %v156
  %180 = vst.msk [vmem:[%s5 + $0x28] sm:$0xff] %vm174, %v161
  %181 = vst.msk [vmem:[%s5 + $0x30] sm:$0xff] %vm174, %v166
  %182 = vst.msk [vmem:[%s5 + $0x38] sm:$0xff] %vm174, %v171
  %v183 = vld [vmem:[%s3] sm:$0xff]
  %v184 = vld [vmem:[%s3 + $0x8] sm:$0xff]
  %v185 = vld [vmem:[%s3 + $0x10] sm:$0xff]
  %v186 = vld [vmem:[%s3 + $0x18] sm:$0xff]
  %v187 = vld [vmem:[#allocation2] sm:$0xff]
  %v188 = vld [vmem:[%s5] sm:$0xff]
  %v190 = vsel %vm174, %v187, 0
  %192 = vmatprep.subr.mxu0 0.0
  %193 = vmatpush1.msra.mxu0 0.0
  %194 = vmatprep.subr.mxu0 0.0
  %195 = vmatpush1.msra.mxu0 0.0
  %196 = vmatprep.subr.mxu0 0.0
  %197 = vmatpush1.msra.mxu0 0.0
  %198 = vmatprep.subr.mxu0 0.0
  %199 = vmatpush1.msra.mxu0 0.0
  %200 = vmatprep.subr.mxu0 0.0
  %201 = vmatpush1.msra.mxu0 0.0
  %202 = vmatprep.subr.mxu0 0.0
  %203 = vmatpush1.msra.mxu0 0.0
  %204 = vmatprep.subr.mxu0 0.0
  %205 = vmatpush1.msra.mxu0 0.0
  %206 = vmatprep.subr.mxu0 0.0
  %207 = vmatpush1.msra.mxu0 0.0
  %208 = vmatprep.subr.mxu0 0.0
  %209 = vmatpush1.msra.mxu0 0.0
  %210 = vmatprep.subr.mxu0 0.0
  %211 = vmatpush1.msra.mxu0 0.0
  %212 = vmatprep.subr.mxu0 0.0
  %213 = vmatpush1.msra.mxu0 0.0
  %214 = vmatprep.subr.mxu0 0.0
  %215 = vmatpush1.msra.mxu0 0.0
  %216 = vmatprep.subr.mxu0 0.0
  %217 = vmatpush1.msra.mxu0 %v186
  %218 = vmatprep.subr.mxu0 0.0
  %219 = vmatpush1.msra.mxu0 %v185
  %220 = vmatprep.subr.mxu0 0.0
  %221 = vmatpush1.msra.mxu0 %v184
  %222 = vmatprep.subr.mxu0 0.0
  %223 = vmatpush1.msra.mxu0 %v183
  %224 = vmatprep.subr.mxu0 0.0
  %225 = vmatpush2.msra.mxu0 0.0
  %226 = vmatprep.subr.mxu0 0.0
  %227 = vmatpush2.msra.mxu0 0.0
  %228 = vmatprep.subr.mxu0 0.0
  %229 = vmatpush2.msra.mxu0 0.0
  %230 = vmatprep.subr.mxu0 0.0
  %231 = vmatpush2.msra.mxu0 0.0
  %232 = vmatprep.subr.mxu0 0.0
  %233 = vmatpush2.msra.mxu0 0.0
  %234 = vmatprep.subr.mxu0 0.0
  %235 = vmatpush2.msra.mxu0 0.0
  %236 = vmatprep.subr.mxu0 0.0
  %237 = vmatpush2.msra.mxu0 0.0
  %238 = vmatprep.subr.mxu0 0.0
  %239 = vmatpush2.msra.mxu0 0.0
  %240 = vmatprep.subr.mxu0 0.0
  %241 = vmatpush2.msra.mxu0 0.0
  %242 = vmatprep.subr.mxu0 0.0
  %243 = vmatpush2.msra.mxu0 0.0
  %244 = vmatprep.subr.mxu0 0.0
  %245 = vmatpush2.msra.mxu0 0.0
  %246 = vmatprep.subr.mxu0 0.0
  %247 = vmatpush2.msra.mxu0 0.0
  %248 = vmatprep.subr.mxu0 0.0
  %249 = vmatpush2.msra.mxu0 0.0
  %250 = vmatprep.subr.mxu0 0.0
  %251 = vmatpush2.msra.mxu0 0.0
  %252 = vmatprep.subr.mxu0 0.0
  %253 = vmatpush2.msra.mxu0 0.0
  %254 = vmatprep.subr.mxu0 0.0
  %255 = vmatpush2.msra.mxu0 0.0
  %256 = vmatprep.mubr.f32.mxu0 0.0
  %257 = vmatmul.mubr.f32.gmra.mxu0 %v190
  %v258 = vpop.f32.mrf.mxu0
  %v259 = vadd.f32 %v188, %v258
  %v260 = vpop.f32.mrf.mxu0
  %261 = vdwg.mxu0
  %v262 = vtanh.pop %v259
  %263 = vst.msk [vmem:[%s5] sm:$0xff] %vm174, %v262
  %s264 = scalar_lea.vmem %s5, 8
  %v265 = vld [vmem:[%s264] sm:$0xff]
  %v267 = vsel %vm174, %v262, 0
  %269 = vmatprep.subr.mxu0 0.0
  %270 = vmatpush1.msra.mxu0 0.0
  %271 = vmatprep.subr.mxu0 0.0
  %272 = vmatpush1.msra.mxu0 0.0
  %273 = vmatprep.subr.mxu0 0.0
  %274 = vmatpush1.msra.mxu0 0.0
  %275 = vmatprep.subr.mxu0 0.0
  %276 = vmatpush1.msra.mxu0 0.0
  %277 = vmatprep.subr.mxu0 0.0
  %278 = vmatpush1.msra.mxu0 0.0
  %279 = vmatprep.subr.mxu0 0.0
  %280 = vmatpush1.msra.mxu0 0.0
  %281 = vmatprep.subr.mxu0 0.0
  %282 = vmatpush1.msra.mxu0 0.0
  %283 = vmatprep.subr.mxu0 0.0
  %284 = vmatpush1.msra.mxu0 0.0
  %285 = vmatprep.subr.mxu0 0.0
  %286 = vmatpush1.msra.mxu0 0.0
  %287 = vmatprep.subr.mxu0 0.0
  %288 = vmatpush1.msra.mxu0 0.0
  %289 = vmatprep.subr.mxu0 0.0
  %290 = vmatpush1.msra.mxu0 0.0
  %291 = vmatprep.subr.mxu0 0.0
  %292 = vmatpush1.msra.mxu0 0.0
  %293 = vmatprep.subr.mxu0 0.0
  %294 = vmatpush1.msra.mxu0 %v186
  %295 = vmatprep.subr.mxu0 0.0
  %296 = vmatpush1.msra.mxu0 %v185
  %297 = vmatprep.subr.mxu0 0.0
  %298 = vmatpush1.msra.mxu0 %v184
  %299 = vmatprep.subr.mxu0 0.0
  %300 = vmatpush1.msra.mxu0 %v183
  %301 = vmatprep.subr.mxu0 0.0
  %302 = vmatpush2.msra.mxu0 0.0
  %303 = vmatprep.subr.mxu0 0.0
  %304 = vmatpush2.msra.mxu0 0.0
  %305 = vmatprep.subr.mxu0 0.0
  %306 = vmatpush2.msra.mxu0 0.0
  %307 = vmatprep.subr.mxu0 0.0
  %308 = vmatpush2.msra.mxu0 0.0
  %309 = vmatprep.subr.mxu0 0.0
  %310 = vmatpush2.msra.mxu0 0.0
  %311 = vmatprep.subr.mxu0 0.0
  %312 = vmatpush2.msra.mxu0 0.0
  %313 = vmatprep.subr.mxu0 0.0
  %314 = vmatpush2.msra.mxu0 0.0
  %315 = vmatprep.subr.mxu0 0.0
  %316 = vmatpush2.msra.mxu0 0.0
  %317 = vmatprep.subr.mxu0 0.0
  %318 = vmatpush2.msra.mxu0 0.0
  %319 = vmatprep.subr.mxu0 0.0
  %320 = vmatpush2.msra.mxu0 0.0
  %321 = vmatprep.subr.mxu0 0.0
  %322 = vmatpush2.msra.mxu0 0.0
  %323 = vmatprep.subr.mxu0 0.0
  %324 = vmatpush2.msra.mxu0 0.0
  %325 = vmatprep.subr.mxu0 0.0
  %326 = vmatpush2.msra.mxu0 0.0
  %327 = vmatprep.subr.mxu0 0.0
  %328 = vmatpush2.msra.mxu0 0.0
  %329 = vmatprep.subr.mxu0 0.0
  %330 = vmatpush2.msra.mxu0 0.0
  %331 = vmatprep.subr.mxu0 0.0
  %332 = vmatpush2.msra.mxu0 0.0
  %333 = vmatprep.mubr.f32.mxu0 0.0
  %334 = vmatmul.mubr.f32.gmra.mxu0 %v267
  %v335 = vpop.f32.mrf.mxu0
  %v336 = vadd.f32 %v265, %v335
  %v337 = vpop.f32.mrf.mxu0
  %338 = vdwg.mxu0
  %v339 = vtanh.pop %v336
  %340 = vst.msk [vmem:[%s264] sm:$0xff] %vm174, %v339
  %s341 = scalar_lea.vmem %s5, 16
  %v342 = vld [vmem:[%s341] sm:$0xff]
  %v344 = vsel %vm174, %v339, 0
  %346 = vmatprep.subr.mxu0 0.0
  %347 = vmatpush1.msra.mxu0 0.0
  %348 = vmatprep.subr.mxu0 0.0
  %349 = vmatpush1.msra.mxu0 0.0
  %350 = vmatprep.subr.mxu0 0.0
  %351 = vmatpush1.msra.mxu0 0.0
  %352 = vmatprep.subr.mxu0 0.0
  %353 = vmatpush1.msra.mxu0 0.0
  %354 = vmatprep.subr.mxu0 0.0
  %355 = vmatpush1.msra.mxu0 0.0
  %356 = vmatprep.subr.mxu0 0.0
  %357 = vmatpush1.msra.mxu0 0.0
  %358 = vmatprep.subr.mxu0 0.0
  %359 = vmatpush1.msra.mxu0 0.0
  %360 = vmatprep.subr.mxu0 0.0
  %361 = vmatpush1.msra.mxu0 0.0
  %362 = vmatprep.subr.mxu0 0.0
  %363 = vmatpush1.msra.mxu0 0.0
  %364 = vmatprep.subr.mxu0 0.0
  %365 = vmatpush1.msra.mxu0 0.0
  %366 = vmatprep.subr.mxu0 0.0
  %367 = vmatpush1.msra.mxu0 0.0
  %368 = vmatprep.subr.mxu0 0.0
  %369 = vmatpush1.msra.mxu0 0.0
  %370 = vmatprep.subr.mxu0 0.0
  %371 = vmatpush1.msra.mxu0 %v186
  %372 = vmatprep.subr.mxu0 0.0
  %373 = vmatpush1.msra.mxu0 %v185
  %374 = vmatprep.subr.mxu0 0.0
  %375 = vmatpush1.msra.mxu0 %v184
  %376 = vmatprep.subr.mxu0 0.0
  %377 = vmatpush1.msra.mxu0 %v183
  %378 = vmatprep.subr.mxu0 0.0
  %379 = vmatpush2.msra.mxu0 0.0
  %380 = vmatprep.subr.mxu0 0.0
  %381 = vmatpush2.msra.mxu0 0.0
  %382 = vmatprep.subr.mxu0 0.0
  %383 = vmatpush2.msra.mxu0 0.0
  %384 = vmatprep.subr.mxu0 0.0
  %385 = vmatpush2.msra.mxu0 0.0
  %386 = vmatprep.subr.mxu0 0.0
  %387 = vmatpush2.msra.mxu0 0.0
  %388 = vmatprep.subr.mxu0 0.0
  %389 = vmatpush2.msra.mxu0 0.0
  %390 = vmatprep.subr.mxu0 0.0
  %391 = vmatpush2.msra.mxu0 0.0
  %392 = vmatprep.subr.mxu0 0.0
  %393 = vmatpush2.msra.mxu0 0.0
  %394 = vmatprep.subr.mxu0 0.0
  %395 = vmatpush2.msra.mxu0 0.0
  %396 = vmatprep.subr.mxu0 0.0
  %397 = vmatpush2.msra.mxu0 0.0
  %398 = vmatprep.subr.mxu0 0.0
  %399 = vmatpush2.msra.mxu0 0.0
  %400 = vmatprep.subr.mxu0 0.0
  %401 = vmatpush2.msra.mxu0 0.0
  %402 = vmatprep.subr.mxu0 0.0
  %403 = vmatpush2.msra.mxu0 0.0
  %404 = vmatprep.subr.mxu0 0.0
  %405 = vmatpush2.msra.mxu0 0.0
  %406 = vmatprep.subr.mxu0 0.0
  %407 = vmatpush2.msra.mxu0 0.0
  %408 = vmatprep.subr.mxu0 0.0
  %409 = vmatpush2.msra.mxu0 0.0
  %410 = vmatprep.mubr.f32.mxu0 0.0
  %411 = vmatmul.mubr.f32.gmra.mxu0 %v344
  %v412 = vpop.f32.mrf.mxu0
  %v413 = vadd.f32 %v342, %v412
  %v414 = vpop.f32.mrf.mxu0
  %415 = vdwg.mxu0
  %v416 = vtanh.pop %v413
  %417 = vst.msk [vmem:[%s341] sm:$0xff] %vm174, %v416
  %s418 = scalar_lea.vmem %s5, 24
  %v419 = vld [vmem:[%s418] sm:$0xff]
  %v421 = vsel %vm174, %v416, 0
  %423 = vmatprep.subr.mxu0 0.0
  %424 = vmatpush1.msra.mxu0 0.0
  %425 = vmatprep.subr.mxu0 0.0
  %426 = vmatpush1.msra.mxu0 0.0
  %427 = vmatprep.subr.mxu0 0.0
  %428 = vmatpush1.msra.mxu0 0.0
  %429 = vmatprep.subr.mxu0 0.0
  %430 = vmatpush1.msra.mxu0 0.0
  %431 = vmatprep.subr.mxu0 0.0
  %432 = vmatpush1.msra.mxu0 0.0
  %433 = vmatprep.subr.mxu0 0.0
  %434 = vmatpush1.msra.mxu0 0.0
  %435 = vmatprep.subr.mxu0 0.0
  %436 = vmatpush1.msra.mxu0 0.0
  %437 = vmatprep.subr.mxu0 0.0
  %438 = vmatpush1.msra.mxu0 0.0
  %439 = vmatprep.subr.mxu0 0.0
  %440 = vmatpush1.msra.mxu0 0.0
  %441 = vmatprep.subr.mxu0 0.0
  %442 = vmatpush1.msra.mxu0 0.0
  %443 = vmatprep.subr.mxu0 0.0
  %444 = vmatpush1.msra.mxu0 0.0
  %445 = vmatprep.subr.mxu0 0.0
  %446 = vmatpush1.msra.mxu0 0.0
  %447 = vmatprep.subr.mxu0 0.0
  %448 = vmatpush1.msra.mxu0 %v186
  %449 = vmatprep.subr.mxu0 0.0
  %450 = vmatpush1.msra.mxu0 %v185
  %451 = vmatprep.subr.mxu0 0.0
  %452 = vmatpush1.msra.mxu0 %v184
  %453 = vmatprep.subr.mxu0 0.0
  %454 = vmatpush1.msra.mxu0 %v183
  %455 = vmatprep.subr.mxu0 0.0
  %456 = vmatpush2.msra.mxu0 0.0
  %457 = vmatprep.subr.mxu0 0.0
  %458 = vmatpush2.msra.mxu0 0.0
  %459 = vmatprep.subr.mxu0 0.0
  %460 = vmatpush2.msra.mxu0 0.0
  %461 = vmatprep.subr.mxu0 0.0
  %462 = vmatpush2.msra.mxu0 0.0
  %463 = vmatprep.subr.mxu0 0.0
  %464 = vmatpush2.msra.mxu0 0.0
  %465 = vmatprep.subr.mxu0 0.0
  %466 = vmatpush2.msra.mxu0 0.0
  %467 = vmatprep.subr.mxu0 0.0
  %468 = vmatpush2.msra.mxu0 0.0
  %469 = vmatprep.subr.mxu0 0.0
  %470 = vmatpush2.msra.mxu0 0.0
  %471 = vmatprep.subr.mxu0 0.0
  %472 = vmatpush2.msra.mxu0 0.0
  %473 = vmatprep.subr.mxu0 0.0
  %474 = vmatpush2.msra.mxu0 0.0
  %475 = vmatprep.subr.mxu0 0.0
  %476 = vmatpush2.msra.mxu0 0.0
  %477 = vmatprep.subr.mxu0 0.0
  %478 = vmatpush2.msra.mxu0 0.0
  %479 = vmatprep.subr.mxu0 0.0
  %480 = vmatpush2.msra.mxu0 0.0
  %481 = vmatprep.subr.mxu0 0.0
  %482 = vmatpush2.msra.mxu0 0.0
  %483 = vmatprep.subr.mxu0 0.0
  %484 = vmatpush2.msra.mxu0 0.0
  %485 = vmatprep.subr.mxu0 0.0
  %486 = vmatpush2.msra.mxu0 0.0
  %487 = vmatprep.mubr.f32.mxu0 0.0
  %488 = vmatmul.mubr.f32.gmra.mxu0 %v421
  %v489 = vpop.f32.mrf.mxu0
  %v490 = vadd.f32 %v419, %v489
  %v491 = vpop.f32.mrf.mxu0
  %492 = vdwg.mxu0
  %v493 = vtanh.pop %v490
  %494 = vst.msk [vmem:[%s418] sm:$0xff] %vm174, %v493
  %s495 = scalar_lea.vmem %s5, 32
  %v496 = vld [vmem:[%s495] sm:$0xff]
  %v498 = vsel %vm174, %v493, 0
  %500 = vmatprep.subr.mxu0 0.0
  %501 = vmatpush1.msra.mxu0 0.0
  %502 = vmatprep.subr.mxu0 0.0
  %503 = vmatpush1.msra.mxu0 0.0
  %504 = vmatprep.subr.mxu0 0.0
  %505 = vmatpush1.msra.mxu0 0.0
  %506 = vmatprep.subr.mxu0 0.0
  %507 = vmatpush1.msra.mxu0 0.0
  %508 = vmatprep.subr.mxu0 0.0
  %509 = vmatpush1.msra.mxu0 0.0
  %510 = vmatprep.subr.mxu0 0.0
  %511 = vmatpush1.msra.mxu0 0.0
  %512 = vmatprep.subr.mxu0 0.0
  %513 = vmatpush1.msra.mxu0 0.0
  %514 = vmatprep.subr.mxu0 0.0
  %515 = vmatpush1.msra.mxu0 0.0
  %516 = vmatprep.subr.mxu0 0.0
  %517 = vmatpush1.msra.mxu0 0.0
  %518 = vmatprep.subr.mxu0 0.0
  %519 = vmatpush1.msra.mxu0 0.0
  %520 = vmatprep.subr.mxu0 0.0
  %521 = vmatpush1.msra.mxu0 0.0
  %522 = vmatprep.subr.mxu0 0.0
  %523 = vmatpush1.msra.mxu0 0.0
  %524 = vmatprep.subr.mxu0 0.0
  %525 = vmatpush1.msra.mxu0 %v186
  %526 = vmatprep.subr.mxu0 0.0
  %527 = vmatpush1.msra.mxu0 %v185
  %528 = vmatprep.subr.mxu0 0.0
  %529 = vmatpush1.msra.mxu0 %v184
  %530 = vmatprep.subr.mxu0 0.0
  %531 = vmatpush1.msra.mxu0 %v183
  %532 = vmatprep.subr.mxu0 0.0
  %533 = vmatpush2.msra.mxu0 0.0
  %534 = vmatprep.subr.mxu0 0.0
  %535 = vmatpush2.msra.mxu0 0.0
  %536 = vmatprep.subr.mxu0 0.0
  %537 = vmatpush2.msra.mxu0 0.0
  %538 = vmatprep.subr.mxu0 0.0
  %539 = vmatpush2.msra.mxu0 0.0
  %540 = vmatprep.subr.mxu0 0.0
  %541 = vmatpush2.msra.mxu0 0.0
  %542 = vmatprep.subr.mxu0 0.0
  %543 = vmatpush2.msra.mxu0 0.0
  %544 = vmatprep.subr.mxu0 0.0
  %545 = vmatpush2.msra.mxu0 0.0
  %546 = vmatprep.subr.mxu0 0.0
  %547 = vmatpush2.msra.mxu0 0.0
  %548 = vmatprep.subr.mxu0 0.0
  %549 = vmatpush2.msra.mxu0 0.0
  %550 = vmatprep.subr.mxu0 0.0
  %551 = vmatpush2.msra.mxu0 0.0
  %552 = vmatprep.subr.mxu0 0.0
  %553 = vmatpush2.msra.mxu0 0.0
  %554 = vmatprep.subr.mxu0 0.0
  %555 = vmatpush2.msra.mxu0 0.0
  %556 = vmatprep.subr.mxu0 0.0
  %557 = vmatpush2.msra.mxu0 0.0
  %558 = vmatprep.subr.mxu0 0.0
  %559 = vmatpush2.msra.mxu0 0.0
  %560 = vmatprep.subr.mxu0 0.0
  %561 = vmatpush2.msra.mxu0 0.0
  %562 = vmatprep.subr.mxu0 0.0
  %563 = vmatpush2.msra.mxu0 0.0
  %564 = vmatprep.mubr.f32.mxu0 0.0
  %565 = vmatmul.mubr.f32.gmra.mxu0 %v498
  %v566 = vpop.f32.mrf.mxu0
  %v567 = vadd.f32 %v496, %v566
  %v568 = vpop.f32.mrf.mxu0
  %569 = vdwg.mxu0
  %v570 = vtanh.pop %v567
  %571 = vst.msk [vmem:[%s495] sm:$0xff] %vm174, %v570
  %s572 = scalar_lea.vmem %s5, 40
  %v573 = vld [vmem:[%s572] sm:$0xff]
  %v575 = vsel %vm174, %v570, 0
  %577 = vmatprep.subr.mxu0 0.0
  %578 = vmatpush1.msra.mxu0 0.0
  %579 = vmatprep.subr.mxu0 0.0
  %580 = vmatpush1.msra.mxu0 0.0
  %581 = vmatprep.subr.mxu0 0.0
  %582 = vmatpush1.msra.mxu0 0.0
  %583 = vmatprep.subr.mxu0 0.0
  %584 = vmatpush1.msra.mxu0 0.0
  %585 = vmatprep.subr.mxu0 0.0
  %586 = vmatpush1.msra.mxu0 0.0
  %587 = vmatprep.subr.mxu0 0.0
  %588 = vmatpush1.msra.mxu0 0.0
  %589 = vmatprep.subr.mxu0 0.0
  %590 = vmatpush1.msra.mxu0 0.0
  %591 = vmatprep.subr.mxu0 0.0
  %592 = vmatpush1.msra.mxu0 0.0
  %593 = vmatprep.subr.mxu0 0.0
  %594 = vmatpush1.msra.mxu0 0.0
  %595 = vmatprep.subr.mxu0 0.0
  %596 = vmatpush1.msra.mxu0 0.0
  %597 = vmatprep.subr.mxu0 0.0
  %598 = vmatpush1.msra.mxu0 0.0
  %599 = vmatprep.subr.mxu0 0.0
  %600 = vmatpush1.msra.mxu0 0.0
  %601 = vmatprep.subr.mxu0 0.0
  %602 = vmatpush1.msra.mxu0 %v186
  %603 = vmatprep.subr.mxu0 0.0
  %604 = vmatpush1.msra.mxu0 %v185
  %605 = vmatprep.subr.mxu0 0.0
  %606 = vmatpush1.msra.mxu0 %v184
  %607 = vmatprep.subr.mxu0 0.0
  %608 = vmatpush1.msra.mxu0 %v183
  %609 = vmatprep.subr.mxu0 0.0
  %610 = vmatpush2.msra.mxu0 0.0
  %611 = vmatprep.subr.mxu0 0.0
  %612 = vmatpush2.msra.mxu0 0.0
  %613 = vmatprep.subr.mxu0 0.0
  %614 = vmatpush2.msra.mxu0 0.0
  %615 = vmatprep.subr.mxu0 0.0
  %616 = vmatpush2.msra.mxu0 0.0
  %617 = vmatprep.subr.mxu0 0.0
  %618 = vmatpush2.msra.mxu0 0.0
  %619 = vmatprep.subr.mxu0 0.0
  %620 = vmatpush2.msra.mxu0 0.0
  %621 = vmatprep.subr.mxu0 0.0
  %622 = vmatpush2.msra.mxu0 0.0
  %623 = vmatprep.subr.mxu0 0.0
  %624 = vmatpush2.msra.mxu0 0.0
  %625 = vmatprep.subr.mxu0 0.0
  %626 = vmatpush2.msra.mxu0 0.0
  %627 = vmatprep.subr.mxu0 0.0
  %628 = vmatpush2.msra.mxu0 0.0
  %629 = vmatprep.subr.mxu0 0.0
  %630 = vmatpush2.msra.mxu0 0.0
  %631 = vmatprep.subr.mxu0 0.0
  %632 = vmatpush2.msra.mxu0 0.0
  %633 = vmatprep.subr.mxu0 0.0
  %634 = vmatpush2.msra.mxu0 0.0
  %635 = vmatprep.subr.mxu0 0.0
  %636 = vmatpush2.msra.mxu0 0.0
  %637 = vmatprep.subr.mxu0 0.0
  %638 = vmatpush2.msra.mxu0 0.0
  %639 = vmatprep.subr.mxu0 0.0
  %640 = vmatpush2.msra.mxu0 0.0
  %641 = vmatprep.mubr.f32.mxu0 0.0
  %642 = vmatmul.mubr.f32.gmra.mxu0 %v575
  %v643 = vpop.f32.mrf.mxu0
  %v644 = vadd.f32 %v573, %v643
  %v645 = vpop.f32.mrf.mxu0
  %646 = vdwg.mxu0
  %v647 = vtanh.pop %v644
  %648 = vst.msk [vmem:[%s572] sm:$0xff] %vm174, %v647
  %s649 = scalar_lea.vmem %s5, 48
  %v650 = vld [vmem:[%s649] sm:$0xff]
  %v652 = vsel %vm174, %v647, 0
  %654 = vmatprep.subr.mxu0 0.0
  %655 = vmatpush1.msra.mxu0 0.0
  %656 = vmatprep.subr.mxu0 0.0
  %657 = vmatpush1.msra.mxu0 0.0
  %658 = vmatprep.subr.mxu0 0.0
  %659 = vmatpush1.msra.mxu0 0.0
  %660 = vmatprep.subr.mxu0 0.0
  %661 = vmatpush1.msra.mxu0 0.0
  %662 = vmatprep.subr.mxu0 0.0
  %663 = vmatpush1.msra.mxu0 0.0
  %664 = vmatprep.subr.mxu0 0.0
  %665 = vmatpush1.msra.mxu0 0.0
  %666 = vmatprep.subr.mxu0 0.0
  %667 = vmatpush1.msra.mxu0 0.0
  %668 = vmatprep.subr.mxu0 0.0
  %669 = vmatpush1.msra.mxu0 0.0
  %670 = vmatprep.subr.mxu0 0.0
  %671 = vmatpush1.msra.mxu0 0.0
  %672 = vmatprep.subr.mxu0 0.0
  %673 = vmatpush1.msra.mxu0 0.0
  %674 = vmatprep.subr.mxu0 0.0
  %675 = vmatpush1.msra.mxu0 0.0
  %676 = vmatprep.subr.mxu0 0.0
  %677 = vmatpush1.msra.mxu0 0.0
  %678 = vmatprep.subr.mxu0 0.0
  %679 = vmatpush1.msra.mxu0 %v186
  %680 = vmatprep.subr.mxu0 0.0
  %681 = vmatpush1.msra.mxu0 %v185
  %682 = vmatprep.subr.mxu0 0.0
  %683 = vmatpush1.msra.mxu0 %v184
  %684 = vmatprep.subr.mxu0 0.0
  %685 = vmatpush1.msra.mxu0 %v183
  %686 = vmatprep.subr.mxu0 0.0
  %687 = vmatpush2.msra.mxu0 0.0
  %688 = vmatprep.subr.mxu0 0.0
  %689 = vmatpush2.msra.mxu0 0.0
  %690 = vmatprep.subr.mxu0 0.0
  %691 = vmatpush2.msra.mxu0 0.0
  %692 = vmatprep.subr.mxu0 0.0
  %693 = vmatpush2.msra.mxu0 0.0
  %694 = vmatprep.subr.mxu0 0.0
  %695 = vmatpush2.msra.mxu0 0.0
  %696 = vmatprep.subr.mxu0 0.0
  %697 = vmatpush2.msra.mxu0 0.0
  %698 = vmatprep.subr.mxu0 0.0
  %699 = vmatpush2.msra.mxu0 0.0
  %700 = vmatprep.subr.mxu0 0.0
  %701 = vmatpush2.msra.mxu0 0.0
  %702 = vmatprep.subr.mxu0 0.0
  %703 = vmatpush2.msra.mxu0 0.0
  %704 = vmatprep.subr.mxu0 0.0
  %705 = vmatpush2.msra.mxu0 0.0
  %706 = vmatprep.subr.mxu0 0.0
  %707 = vmatpush2.msra.mxu0 0.0
  %708 = vmatprep.subr.mxu0 0.0
  %709 = vmatpush2.msra.mxu0 0.0
  %710 = vmatprep.subr.mxu0 0.0
  %711 = vmatpush2.msra.mxu0 0.0
  %712 = vmatprep.subr.mxu0 0.0
  %713 = vmatpush2.msra.mxu0 0.0
  %714 = vmatprep.subr.mxu0 0.0
  %715 = vmatpush2.msra.mxu0 0.0
  %716 = vmatprep.subr.mxu0 0.0
  %717 = vmatpush2.msra.mxu0 0.0
  %718 = vmatprep.mubr.f32.mxu0 0.0
  %719 = vmatmul.mubr.f32.gmra.mxu0 %v652
  %v720 = vpop.f32.mrf.mxu0
  %v721 = vadd.f32 %v650, %v720
  %v722 = vpop.f32.mrf.mxu0
  %723 = vdwg.mxu0
  %v724 = vtanh.pop %v721
  %725 = vst.msk [vmem:[%s649] sm:$0xff] %vm174, %v724
  %s726 = scalar_lea.vmem %s5, 56
  %v727 = vld [vmem:[%s726] sm:$0xff]
  %v729 = vsel %vm174, %v724, 0
  %731 = vmatprep.subr.mxu0 0.0
  %732 = vmatpush1.msra.mxu0 0.0
  %733 = vmatprep.subr.mxu0 0.0
  %734 = vmatpush1.msra.mxu0 0.0
  %735 = vmatprep.subr.mxu0 0.0
  %736 = vmatpush1.msra.mxu0 0.0
  %737 = vmatprep.subr.mxu0 0.0
  %738 = vmatpush1.msra.mxu0 0.0
  %739 = vmatprep.subr.mxu0 0.0
  %740 = vmatpush1.msra.mxu0 0.0
  %741 = vmatprep.subr.mxu0 0.0
  %742 = vmatpush1.msra.mxu0 0.0
  %743 = vmatprep.subr.mxu0 0.0
  %744 = vmatpush1.msra.mxu0 0.0
  %745 = vmatprep.subr.mxu0 0.0
  %746 = vmatpush1.msra.mxu0 0.0
  %747 = vmatprep.subr.mxu0 0.0
  %748 = vmatpush1.msra.mxu0 0.0
  %749 = vmatprep.subr.mxu0 0.0
  %750 = vmatpush1.msra.mxu0 0.0
  %751 = vmatprep.subr.mxu0 0.0
  %752 = vmatpush1.msra.mxu0 0.0
  %753 = vmatprep.subr.mxu0 0.0
  %754 = vmatpush1.msra.mxu0 0.0
  %755 = vmatprep.subr.mxu0 0.0
  %756 = vmatpush1.msra.mxu0 %v186
  %757 = vmatprep.subr.mxu0 0.0
  %758 = vmatpush1.msra.mxu0 %v185
  %759 = vmatprep.subr.mxu0 0.0
  %760 = vmatpush1.msra.mxu0 %v184
  %761 = vmatprep.subr.mxu0 0.0
  %762 = vmatpush1.msra.mxu0 %v183
  %763 = vmatprep.subr.mxu0 0.0
  %764 = vmatpush2.msra.mxu0 0.0
  %765 = vmatprep.subr.mxu0 0.0
  %766 = vmatpush2.msra.mxu0 0.0
  %767 = vmatprep.subr.mxu0 0.0
  %768 = vmatpush2.msra.mxu0 0.0
  %769 = vmatprep.subr.mxu0 0.0
  %770 = vmatpush2.msra.mxu0 0.0
  %771 = vmatprep.subr.mxu0 0.0
  %772 = vmatpush2.msra.mxu0 0.0
  %773 = vmatprep.subr.mxu0 0.0
  %774 = vmatpush2.msra.mxu0 0.0
  %775 = vmatprep.subr.mxu0 0.0
  %776 = vmatpush2.msra.mxu0 0.0
  %777 = vmatprep.subr.mxu0 0.0
  %778 = vmatpush2.msra.mxu0 0.0
  %779 = vmatprep.subr.mxu0 0.0
  %780 = vmatpush2.msra.mxu0 0.0
  %781 = vmatprep.subr.mxu0 0.0
  %782 = vmatpush2.msra.mxu0 0.0
  %783 = vmatprep.subr.mxu0 0.0
  %784 = vmatpush2.msra.mxu0 0.0
  %785 = vmatprep.subr.mxu0 0.0
  %786 = vmatpush2.msra.mxu0 0.0
  %787 = vmatprep.subr.mxu0 0.0
  %788 = vmatpush2.msra.mxu0 0.0
  %789 = vmatprep.subr.mxu0 0.0
  %790 = vmatpush2.msra.mxu0 0.0
  %791 = vmatprep.subr.mxu0 0.0
  %792 = vmatpush2.msra.mxu0 0.0
  %793 = vmatprep.subr.mxu0 0.0
  %794 = vmatpush2.msra.mxu0 0.0
  %795 = vmatprep.mubr.f32.mxu0 0.0
  %796 = vmatmul.mubr.f32.gmra.mxu0 %v729
  %v797 = vpop.f32.mrf.mxu0
  %v798 = vadd.f32 %v727, %v797
  %v799 = vpop.f32.mrf.mxu0
  %800 = vdwg.mxu0
  %v801 = vtanh.pop %v798
  %802 = vst.msk [vmem:[%s726] sm:$0xff] %vm174, %v801
  %803 = vst.msk [vmem:[#allocation2] sm:$0xff] %vm174, %v801
  // Predicated region
  $region26: #{tpu_custom_call.1} parent=0 // pred_check
    _
  $region27: #{tpu_custom_call.1} parent=0 // pred_check_branch
    %805 = sbr.rel (0) target = $region29
  $region28: #{tpu_custom_call.1} parent=0 // pred_region
    _
  $region29: #{tpu_custom_call.1} parent=0 // pred_fallthru
    _
  // Predicated region
  $region30: #{tpu_custom_call.1} parent=0 // pred_check
    _
  $region31: #{tpu_custom_call.1} parent=0 // pred_check_branch
    %807 = sbr.rel (0) target = $region33
  $region32: #{tpu_custom_call.1} parent=0 // pred_region
    _
  $region33: #{tpu_custom_call.1} parent=0 // pred_fallthru
    _

</llo_original>
